<compile_context>
chip_gen: v5e
topology: v5e:2x2
jax: 0.10.0
libtpu: 0.0.40
codegen_flags: <defaults>
</compile_context>

<pallas_src>
import jax
import jax.numpy as jnp
from jax.experimental import pallas as pl
from jax.experimental.pallas import tpu as pltpu

_LANE = 128


def _round_up(x, m):
    return ((x + m - 1) // m) * m


def _choose_tiles(N, HW, C_in, C_out, itemsize,
                  target_step_bytes=4 << 20,        # ~4 MiB of x+out HBM traffic / step
                  block_elem_budget_bytes=8 << 20,  # VMEM cap for one in+out block pair
                  min_grid_steps=4,                 # keep the pipeline busy
                  min_step_bytes=1 << 20):          # never shrink a step below ~1 MiB
    """Pick (nb, t_hw): the batch and spatial extents of the (nb, C, t_hw) blocks."""
    per_elem = (C_in + C_out) * itemsize                       # bytes per (batch, pixel)
    want = max(_LANE, -(-target_step_bytes // per_elem))       # elems/step for traffic target
    cap = max(_LANE, block_elem_budget_bytes // per_elem)      # elems/step VMEM cap

    if HW >= want:
        # Large feature map: a spatial tile alone reaches the traffic target.
        nb = 1
        t_hw = min(HW, _round_up(min(want, cap), _LANE))
    else:
        # Small feature map: take the whole spatial extent, widen the batch dim.
        t_hw = HW
        nb = max(1, min(N, want // max(HW, 1), cap // max(HW, 1)))

    # Keep >= min_grid_steps so double-buffering can overlap DMA with compute,
    # but only while each step still moves >= min_step_bytes.
    def nsteps(nb_, t_):
        return (-(-N // nb_)) * (-(-HW // t_))

    while nsteps(nb, t_hw) < min_grid_steps:
        if nb > 1 and (-(-nb // 2)) * HW * per_elem >= min_step_bytes:
            nb = -(-nb // 2)
        elif nb == 1 and t_hw > _LANE and \
                _round_up(-(-t_hw // 2), _LANE) * per_elem >= min_step_bytes:
            t_hw = min(HW, _round_up(-(-t_hw // 2), _LANE))
        else:
            break
    return nb, t_hw


def _fused_kernel(x_ref, w_ref, b_ref, o_ref):
    """Single pre-composed projection: y = W x + b  (op == Identity folded in)."""
    # nb is a small static block dim -> unrolled plain 2D MXU dots, lane-dense stores.
    for b in range(x_ref.shape[0]):
        y = jnp.dot(w_ref[...], x_ref[b], preferred_element_type=jnp.float32)
        o_ref[b] = (y + b_ref[...]).astype(o_ref.dtype)


def _two_proj_kernel(x_ref, w1_ref, b1_ref, w2_ref, b2_ref, o_ref):
    """General path: proj1 -> (op == Identity) -> proj2, BN folded into W/b."""
    for b in range(x_ref.shape[0]):
        h = jnp.dot(w1_ref[...], x_ref[b],
                    preferred_element_type=jnp.float32) + b1_ref[...]
        # op == Identity (see TODO at top of file)
        y = jnp.dot(w2_ref[...], h.astype(w2_ref.dtype),
                    preferred_element_type=jnp.float32) + b2_ref[...]
        o_ref[b] = y.astype(o_ref.dtype)


def channel_resize_wrapper(x_nchw, folded_params, *, fuse_identity_op=True,
                           target_step_bytes=4 << 20,
                           block_elem_budget_bytes=8 << 20):
    """x_nchw: (N, C_in, H, W).  Returns (N, C_out, H, W) in NCHW (no transposes)."""
    w1f, b1, w2f, b2 = folded_params
    C_hid, C_in = w1f.shape
    C_out, _ = w2f.shape
    N, C, H, W = x_nchw.shape
    assert C == C_in
    HW = H * W
    itemsize = jnp.dtype(x_nchw.dtype).itemsize

    # Free (contiguous) reshape: spatial dim becomes the lane dim.
    x = x_nchw.reshape(N, C_in, HW)

    nb, t_hw = _choose_tiles(N, HW, C_in, C_out, itemsize,
                             target_step_bytes=target_step_bytes,
                             block_elem_budget_bytes=block_elem_budget_bytes)
    grid = (pl.cdiv(N, nb), pl.cdiv(HW, t_hw))

    if fuse_identity_op:
        # Pre-compose the two 1x1 convs (valid only because op == Identity):
        #   y = W2(W1 x + b1) + b2 = (W2 W1) x + (W2 b1 + b2)
        w = w2f @ w1f                    # (C_out, C_in)
        b = w2f @ b1 + b2                # (C_out, 1)
        operands = (x, w, b)
        kernel = _fused_kernel
        in_specs = [
            pl.BlockSpec((nb, C_in, t_hw), lambda n, j: (n, 0, j)),   # x tile
            pl.BlockSpec((C_out, C_in), lambda n, j: (0, 0)),         # composed weight
            pl.BlockSpec((C_out, 1), lambda n, j: (0, 0)),            # composed bias
        ]
        flops = 2 * N * HW * C_in * C_out
    else:
        operands = (x, w1f, b1, w2f, b2)
        kernel = _two_proj_kernel
        in_specs = [
            pl.BlockSpec((nb, C_in, t_hw), lambda n, j: (n, 0, j)),   # x tile
            pl.BlockSpec((C_hid, C_in), lambda n, j: (0, 0)),         # W1 (BN1-folded)
            pl.BlockSpec((C_hid, 1), lambda n, j: (0, 0)),            # BN1 shift
            pl.BlockSpec((C_out, C_hid), lambda n, j: (0, 0)),        # W2 (BN2-folded)
            pl.BlockSpec((C_out, 1), lambda n, j: (0, 0)),            # BN2 shift
        ]
        flops = 2 * N * HW * (C_in * C_hid + C_hid * C_out)

    weight_bytes = sum(int(a.size) * a.dtype.itemsize for a in operands[1:])

    # Double-buffered in/out blocks + resident weights -> explicit scoped-VMEM limit.
    block_bytes = nb * (C_in + C_out) * t_hw * itemsize
    vmem_needed = 2 * block_bytes + 2 * weight_bytes + (1 << 20)
    vmem_limit = int(min(48 << 20, max(16 << 20, vmem_needed + (8 << 20))))

    bytes_accessed = N * (C_in + C_out) * HW * itemsize + weight_bytes

    out = pl.pallas_call(
        kernel,
        out_shape=jax.ShapeDtypeStruct((N, C_out, HW), x_nchw.dtype),
        grid_spec=pltpu.PrefetchScalarGridSpec(
            num_scalar_prefetch=0,
            grid=grid,
            in_specs=in_specs,
            out_specs=pl.BlockSpec((nb, C_out, t_hw), lambda n, j: (n, 0, j)),
        ),
        compiler_params=pltpu.CompilerParams(
            dimension_semantics=("parallel", "parallel"),
            vmem_limit_bytes=vmem_limit),
        cost_estimate=pl.CostEstimate(
            flops=flops, transcendentals=0, bytes_accessed=bytes_accessed),
    )(*operands)

    return out.reshape(N, C_out, H, W)


def make_raw_params(key, C_in, C_hid, C_out, dtype=jnp.float32):
    """Deterministic synthetic parameters matching the PyTorch module.

    Conv2d weights (C_out, C_in, 1, 1) are stored squeezed as (C_out, C_in).
    BatchNorm2d params are kept raw (gamma, beta, running_mean, running_var).
    """
    k = jax.random.split(key, 10)
    w1 = jax.random.normal(k[0], (C_hid, C_in), dtype) * 0.1
    gamma1 = 1.0 + 0.1 * jax.random.normal(k[1], (C_hid,), dtype)
    beta1 = 0.1 * jax.random.normal(k[2], (C_hid,), dtype)
    mean1 = 0.05 * jax.random.normal(k[3], (C_hid,), dtype)
    var1 = jnp.abs(1.0 + 0.1 * jax.random.normal(k[4], (C_hid,), dtype))

    w2 = jax.random.normal(k[5], (C_out, C_hid), dtype) * 0.1
    gamma2 = 1.0 + 0.1 * jax.random.normal(k[6], (C_out,), dtype)
    beta2 = 0.1 * jax.random.normal(k[7], (C_out,), dtype)
    mean2 = 0.05 * jax.random.normal(k[8], (C_out,), dtype)
    var2 = jnp.abs(1.0 + 0.1 * jax.random.normal(k[9], (C_out,), dtype))

    return (w1, gamma1, beta1, mean1, var1, w2, gamma2, beta2, mean2, var2)


def fold_params(raw, eps=1e-5):
    """Fold eval-mode BatchNorm into the 1x1 conv weights + a per-channel bias."""
    w1, g1, be1, m1, v1, w2, g2, be2, m2, v2 = raw
    s1 = g1 / jnp.sqrt(v1 + eps)
    s2 = g2 / jnp.sqrt(v2 + eps)
    w1f = w1 * s1[:, None]                       # (C_hid, C_in)
    b1 = (be1 - m1 * s1)[:, None]                # (C_hid, 1)
    w2f = w2 * s2[:, None]                       # (C_out, C_hid)
    b2 = (be2 - m2 * s2)[:, None]                # (C_out, 1)
    return (w1f, b1, w2f, b2)


def reference(x_nchw, raw, eps=1e-5):
    """Pure-JAX reference with explicit (unfolded) eval-mode BatchNorm."""
    w1, g1, be1, m1, v1, w2, g2, be2, m2, v2 = raw
    N, C_in, H, W = x_nchw.shape
    x = x_nchw.reshape(N, C_in, H * W)
    h = jnp.einsum('oc,ncp->nop', w1, x)
    h = (h - m1[None, :, None]) / jnp.sqrt(v1[None, :, None] + eps) \
        * g1[None, :, None] + be1[None, :, None]
    # op == Identity
    y = jnp.einsum('oc,ncp->nop', w2, h)
    y = (y - m2[None, :, None]) / jnp.sqrt(v2[None, :, None] + eps) \
        * g2[None, :, None] + be2[None, :, None]
    C_out = w2.shape[0]
    return y.reshape(N, C_out, H, W)


if __name__ == "__main__":
    key = jax.random.PRNGKey(0)
    kx, kp = jax.random.split(key)

    N, C_in, C_hid, C_out, H, W = 2, 4, 8, 4, 16, 16
    x = jax.random.normal(kx, (N, C_in, H, W), jnp.float32)
    raw = make_raw_params(kp, C_in, C_hid, C_out)
    folded = fold_params(raw)

    ref = reference(x, raw)

    # Default (fused-projection, op == Identity) path.
    out_fused = jax.block_until_ready(channel_resize_wrapper(x, folded))
    # General two-projection path (kept for when a real `op` is inserted).
    out_two = jax.block_until_ready(
        channel_resize_wrapper(x, folded, fuse_identity_op=False))

    assert out_fused.shape == (N, C_out, H, W)
    assert out_two.shape == (N, C_out, H, W)
    assert jnp.allclose(out_fused, ref, atol=1e-4, rtol=1e-4)
    assert jnp.allclose(out_two, ref, atol=1e-4, rtol=1e-4)

    print("KERNEL_OK")
</pallas_src>

<mosaic_0001>
module attributes {stable_mosaic.version = 11 : i64} {
  func.func @_fused_kernel(%arg0: i32, %arg1: i32, %arg2: memref<2x4x256xf32, #tpu.memory_space<vmem>>, %arg3: memref<4x4xf32, #tpu.memory_space<vmem>>, %arg4: memref<4x1xf32, #tpu.memory_space<vmem>>, %arg5: memref<2x4x256xf32, #tpu.memory_space<vmem>>) attributes {dimension_semantics = [#tpu.dimension_semantics<parallel>, #tpu.dimension_semantics<parallel>], iteration_bounds = array<i64: 1, 1>, scalar_prefetch = 0 : i64, scratch_operands = 0 : i64, tpu.core_type = #tpu.core_type<tc>, window_params = [{transform_indices = @transform_0, window_bounds = array<i64: 2, 4, 256>}, {pipeline_mode = #tpu.pipeline_mode<synchronous>, transform_indices = @transform_1, window_bounds = array<i64: 4, 4>}, {pipeline_mode = #tpu.pipeline_mode<synchronous>, transform_indices = @transform_2, window_bounds = array<i64: 4, 1>}, {transform_indices = @transform_3, window_bounds = array<i64: 2, 4, 256>}]} {
    %c0 = arith.constant 0 : index
    %c0_0 = arith.constant 0 : index
    %0 = vector.load %arg3[%c0, %c0_0] : memref<4x4xf32, #tpu.memory_space<vmem>>, vector<4x4xf32>
    %c0_1 = arith.constant 0 : index
    %c0_2 = arith.constant 0 : index
    %c0_3 = arith.constant 0 : index
    %1 = vector.load %arg2[%c0_1, %c0_2, %c0_3] : memref<2x4x256xf32, #tpu.memory_space<vmem>>, vector<1x4x256xf32>
    %2 = vector.shape_cast %1 : vector<1x4x256xf32> to vector<4x256xf32>
    %cst = arith.constant dense<0.000000e+00> : vector<4x256xf32>
    %3 = tpu.matmul %0, %2, %cst {dimension_numbers = #tpu.dot_dimension_numbers<[1], [0], [0], [1], [0, 0, 1, 1], [], []>} : vector<4x4xf32>, vector<4x256xf32>, vector<4x256xf32> -> vector<4x256xf32>
    %c0_4 = arith.constant 0 : index
    %c0_5 = arith.constant 0 : index
    %4 = vector.load %arg4[%c0_4, %c0_5] : memref<4x1xf32, #tpu.memory_space<vmem>>, vector<4x1xf32>
    %5 = vector.broadcast %4 : vector<4x1xf32> to vector<4x256xf32>
    %6 = arith.addf %3, %5 : vector<4x256xf32>
    %c0_6 = arith.constant 0 : index
    %c0_7 = arith.constant 0 : index
    %c0_8 = arith.constant 0 : index
    %7 = vector.load %arg5[%c0_6, %c0_7, %c0_8] : memref<2x4x256xf32, #tpu.memory_space<vmem>>, vector<1x4x256xf32>
    %8 = vector.shape_cast %7 : vector<1x4x256xf32> to vector<4x256xf32>
    %9 = vector.shape_cast %6 : vector<4x256xf32> to vector<1x4x256xf32>
    tpu.vector_store %arg5[%c0_6, %c0_7, %c0_8], %9 {strides = array<i32>} : memref<2x4x256xf32, #tpu.memory_space<vmem>>, vector<1x4x256xf32>,
    %c0_9 = arith.constant 0 : index
    %c0_10 = arith.constant 0 : index
    %10 = vector.load %arg3[%c0_9, %c0_10] : memref<4x4xf32, #tpu.memory_space<vmem>>, vector<4x4xf32>
    %c1 = arith.constant 1 : index
    %c0_11 = arith.constant 0 : index
    %c0_12 = arith.constant 0 : index
    %11 = vector.load %arg2[%c1, %c0_11, %c0_12] : memref<2x4x256xf32, #tpu.memory_space<vmem>>, vector<1x4x256xf32>
    %12 = vector.shape_cast %11 : vector<1x4x256xf32> to vector<4x256xf32>
    %cst_13 = arith.constant dense<0.000000e+00> : vector<4x256xf32>
    %13 = tpu.matmul %10, %12, %cst_13 {dimension_numbers = #tpu.dot_dimension_numbers<[1], [0], [0], [1], [0, 0, 1, 1], [], []>} : vector<4x4xf32>, vector<4x256xf32>, vector<4x256xf32> -> vector<4x256xf32>
    %c0_14 = arith.constant 0 : index
    %c0_15 = arith.constant 0 : index
    %14 = vector.load %arg4[%c0_14, %c0_15] : memref<4x1xf32, #tpu.memory_space<vmem>>, vector<4x1xf32>
    %15 = vector.broadcast %14 : vector<4x1xf32> to vector<4x256xf32>
    %16 = arith.addf %13, %15 : vector<4x256xf32>
    %c1_16 = arith.constant 1 : index
    %c0_17 = arith.constant 0 : index
    %c0_18 = arith.constant 0 : index
    %17 = vector.load %arg5[%c1_16, %c0_17, %c0_18] : memref<2x4x256xf32, #tpu.memory_space<vmem>>, vector<1x4x256xf32>
    %18 = vector.shape_cast %17 : vector<1x4x256xf32> to vector<4x256xf32>
    %19 = vector.shape_cast %16 : vector<4x256xf32> to vector<1x4x256xf32>
    tpu.vector_store %arg5[%c1_16, %c0_17, %c0_18], %19 {strides = array<i32>} : memref<2x4x256xf32, #tpu.memory_space<vmem>>, vector<1x4x256xf32>,
    return
  }
  func.func @transform_0(%arg0: i32, %arg1: i32) -> (i32, i32, i32) {
    %c0_i32 = arith.constant 0 : i32
    %c0_i32_0 = arith.constant 0 : i32
    return %arg0, %c0_i32, %arg1 : i32, i32, i32
  }
  func.func @transform_1(%arg0: i32, %arg1: i32) -> (i32, i32) {
    %c0_i32 = arith.constant 0 : i32
    %c0_i32_0 = arith.constant 0 : i32
    %c0_i32_1 = arith.constant 0 : i32
    return %c0_i32, %c0_i32_0 : i32, i32
  }
  func.func @transform_2(%arg0: i32, %arg1: i32) -> (i32, i32) {
    %c0_i32 = arith.constant 0 : i32
    %c0_i32_0 = arith.constant 0 : i32
    %c0_i32_1 = arith.constant 0 : i32
    return %c0_i32, %c0_i32_0 : i32, i32
  }
  func.func @transform_3(%arg0: i32, %arg1: i32) -> (i32, i32, i32) {
    %c0_i32 = arith.constant 0 : i32
    %c0_i32_0 = arith.constant 0 : i32
    return %arg0, %c0_i32, %arg1 : i32, i32, i32
  }
}

</mosaic_0001>

<llo_original>
// kernel: tpu_custom_call.1
$region0: #{tpu_custom_call.1}
  #allocation0 [shape = 'u32[]', space=smem, size = 0x4, offset = 0x4, fixed_abs, tag = 'smem constant byte address 0x4 - core index']
  #allocation1 [shape = 'u32[72,128]{1,0:T(1,128)}', space=vmem, size = 0x9000, scoped, tag = 'internal scratch']
  %s0 = inlined_call_operand.hbm [shape: f32[2,4,256], index: 0, kind: input, shape index: {}]
  %s1 = inlined_call_operand.vmem [shape: f32[4,4], index: 1, kind: input, shape index: {}]
  %s2 = inlined_call_operand.vmem [shape: f32[4,1], index: 2, kind: input, shape index: {}]
  %s3 = inlined_call_operand.hbm [shape: f32[2,4,256], index: 3, kind: output, shape index: {}]
  %s4 = sld [smem:[#allocation0]]
  $region26: #{tpu_custom_call.1} parent=0
    _
  %s6 = ssub.s32 1, %s4
  %s7 = scalar_select 0, %s6, %s4
  $region1: #{tpu_custom_call.1} parent=0
    #allocation2 [shape = 'u8[8192]{0}', space=vmem, size = 0x2000, scoped, tag = 'input window, operand 0, single buffered']
    #allocation3 [shape = 's32[1]{0}', space=sflag, size = 0x4, scoped, tag = 'scoped memory for tpu_custom_call.1']
    #allocation4 [shape = 's32[1]{0}', space=sflag, size = 0x4, scoped, tag = 'scoped memory for tpu_custom_call.1']
    #allocation5 [shape = 'u8[8192]{0}', space=vmem, size = 0x2000, scoped, tag = 'output window, operand 0, single buffered']
    %8 = vsyncpa [#allocation3], 0
    %9 = vsyncpa [#allocation4], 0
    // Predicated region
    $region2: #{tpu_custom_call.1} parent=1 // pred_check
      _
    $region3: #{tpu_custom_call.1} parent=1 // pred_check_branch
      %11 = sbr.rel (0) target = $region5
    $region4: #{tpu_custom_call.1} parent=1 // pred_region
      %13 = vsyncadd [#allocation3], 0
      %s14 = sshll.u32 %s0, 4
      %s15 = int_to_ptr.hbm [resolvable:$true] %s14
      %s16 = sshll.u32 [#allocation2], 4
      %s17 = int_to_ptr.vmem [resolvable:$true] %s16
      %22 = dma.hbm_to_vmem [thread:$0]  %s15, 256, %s17, [#allocation3], 128, 128, 8
    $region5: #{tpu_custom_call.1} parent=1 // pred_fallthru
      _
    // Predicated region
    $region6: #{tpu_custom_call.1} parent=1 // pred_check
      _
    $region7: #{tpu_custom_call.1} parent=1 // pred_check_branch
      %24 = sbr.rel (0) target = $region9
    $region8: #{tpu_custom_call.1} parent=1 // pred_region
      _
    $region9: #{tpu_custom_call.1} parent=1 // pred_fallthru
      _
    // Predicated region
    $region10: #{tpu_custom_call.1} parent=1 // pred_check
      _
    $region11: #{tpu_custom_call.1} parent=1 // pred_check_branch
      %26 = sbr.rel (0) target = $region13
    $region12: #{tpu_custom_call.1} parent=1 // pred_region
      _
    $region13: #{tpu_custom_call.1} parent=1 // pred_fallthru
      _
    // Predicated region
    $region14: #{tpu_custom_call.1} parent=1 // pred_check
      _
    $region15: #{tpu_custom_call.1} parent=1 // pred_check_branch
      %28 = sbr.rel (0) target = $region17
    $region16: #{tpu_custom_call.1} parent=1 // pred_region
      %30 = dma.done [#allocation3], 256
    $region17: #{tpu_custom_call.1} parent=1 // pred_fallthru
      _
    %v31 = vld [vmem:[%s1] sm:$0xf]
    %v32 = vld [vmem:[#allocation2] sm:$0xff]
    %v33 = vld [vmem:[%s2] sm:$0xf]
    %35 = vset.pattern.permute.xlu0 0
    %36 = vperm.xlu0 %35, %v33
    %v37 = vpop.permute.xlu0 %36
    %40 = vst [vmem:[#allocation1] ss:$2 sm:$0xff] %v32
    %v41 = vld.sshfl [vmem:[#allocation1] sm:$0xff pattern:$0x75316420]
    %v42 = vld.sshfl [vmem:[#allocation1 + $0x8] sm:$0xff pattern:$0x75316420]
    %vm43 = vcmask 31744
    %v45 = vsel %vm43, %v31, 0
    %vm47 = vcmask 1043456
    %v48 = vsel %vm47, %v41, 0
    %v50 = vsel %vm47, %v42, 0
    %52 = vmatpush.msra.mxu0 0.0
    %53 = vmatpush.msra.mxu0 0.0
    %54 = vmatpush.msra.mxu0 0.0
    %55 = vmatpush.msra.mxu0 0.0
    %56 = vmatpush.msra.mxu0 0.0
    %57 = vmatpush.msra.mxu0 0.0
    %58 = vmatpush.msra.mxu0 0.0
    %59 = vmatpush.msra.mxu0 0.0
    %60 = vmatpush.msra.mxu0 0.0
    %61 = vmatpush.msra.mxu0 0.0
    %62 = vmatpush.msra.mxu0 0.0
    %63 = vmatpush.msra.mxu0 0.0
    %64 = vmatpush.msra.mxu0 0.0
    %65 = vmatpush.msra.mxu0 0.0
    %66 = vmatpush.msra.mxu0 0.0
    %67 = vmatpush.msra.mxu0 %v48
    %68 = vmatmul.f32.gmra.mxu0 %v45
    %v69 = vpop.f32.mrf.mxu0
    %v70 = vadd.f32 %v37, %v69
    %71 = vdwg.mxu0
    %72 = vmatpush.msra.mxu0 0.0
    %73 = vmatpush.msra.mxu0 0.0
    %74 = vmatpush.msra.mxu0 0.0
    %75 = vmatpush.msra.mxu0 0.0
    %76 = vmatpush.msra.mxu0 0.0
    %77 = vmatpush.msra.mxu0 0.0
    %78 = vmatpush.msra.mxu0 0.0
    %79 = vmatpush.msra.mxu0 0.0
    %80 = vmatpush.msra.mxu0 0.0
    %81 = vmatpush.msra.mxu0 0.0
    %82 = vmatpush.msra.mxu0 0.0
    %83 = vmatpush.msra.mxu0 0.0
    %84 = vmatpush.msra.mxu0 0.0
    %85 = vmatpush.msra.mxu0 0.0
    %86 = vmatpush.msra.mxu0 0.0
    %87 = vmatpush.msra.mxu0 %v50
    %88 = vmatmul.f32.gmra.mxu0 %v45
    %v89 = vpop.f32.mrf.mxu0
    %v90 = vadd.f32 %v37, %v89
    %91 = vdwg.mxu0
    %v94 = vrot.slane %v90, 4
    %v95 = vsel %vm47, %v70, %v94
    %97 = vst [vmem:[#allocation5] sm:$0xff] %v95
    %v98 = vld [vmem:[%s1] sm:$0xf]
    %s99 = scalar_lea.vmem [#allocation2], 8
    %v100 = vld [vmem:[%s99] sm:$0xff]
    %v101 = vld [vmem:[%s2] sm:$0xf]
    %103 = vset.pattern.permute.xlu0 0
    %104 = vperm.xlu0 %103, %v101
    %v105 = vpop.permute.xlu0 %104
    %108 = vst [vmem:[#allocation1] ss:$2 sm:$0xff] %v100
    %v109 = vld.sshfl [vmem:[#allocation1] sm:$0xff pattern:$0x75316420]
    %v110 = vld.sshfl [vmem:[#allocation1 + $0x8] sm:$0xff pattern:$0x75316420]
    %v112 = vsel %vm43, %v98, 0
    %v114 = vsel %vm47, %v109, 0
    %v116 = vsel %vm47, %v110, 0
    %118 = vmatpush.msra.mxu0 0.0
    %119 = vmatpush.msra.mxu0 0.0
    %120 = vmatpush.msra.mxu0 0.0
    %121 = vmatpush.msra.mxu0 0.0
    %122 = vmatpush.msra.mxu0 0.0
    %123 = vmatpush.msra.mxu0 0.0
    %124 = vmatpush.msra.mxu0 0.0
    %125 = vmatpush.msra.mxu0 0.0
    %126 = vmatpush.msra.mxu0 0.0
    %127 = vmatpush.msra.mxu0 0.0
    %128 = vmatpush.msra.mxu0 0.0
    %129 = vmatpush.msra.mxu0 0.0
    %130 = vmatpush.msra.mxu0 0.0
    %131 = vmatpush.msra.mxu0 0.0
    %132 = vmatpush.msra.mxu0 0.0
    %133 = vmatpush.msra.mxu0 %v114
    %134 = vmatmul.f32.gmra.mxu0 %v112
    %v135 = vpop.f32.mrf.mxu0
    %v136 = vadd.f32 %v105, %v135
    %137 = vdwg.mxu0
    %138 = vmatpush.msra.mxu0 0.0
    %139 = vmatpush.msra.mxu0 0.0
    %140 = vmatpush.msra.mxu0 0.0
    %141 = vmatpush.msra.mxu0 0.0
    %142 = vmatpush.msra.mxu0 0.0
    %143 = vmatpush.msra.mxu0 0.0
    %144 = vmatpush.msra.mxu0 0.0
    %145 = vmatpush.msra.mxu0 0.0
    %146 = vmatpush.msra.mxu0 0.0
    %147 = vmatpush.msra.mxu0 0.0
    %148 = vmatpush.msra.mxu0 0.0
    %149 = vmatpush.msra.mxu0 0.0
    %150 = vmatpush.msra.mxu0 0.0
    %151 = vmatpush.msra.mxu0 0.0
    %152 = vmatpush.msra.mxu0 0.0
    %153 = vmatpush.msra.mxu0 %v116
    %154 = vmatmul.f32.gmra.mxu0 %v112
    %v155 = vpop.f32.mrf.mxu0
    %v156 = vadd.f32 %v105, %v155
    %157 = vdwg.mxu0
    %v160 = vrot.slane %v156, 4
    %v161 = vsel %vm47, %v136, %v160
    %s163 = scalar_lea.vmem [#allocation5], 8
    %164 = vst [vmem:[%s163] sm:$0xff] %v161
    // Predicated region
    $region18: #{tpu_custom_call.1} parent=1 // pred_check
      _
    $region19: #{tpu_custom_call.1} parent=1 // pred_check_branch
      %166 = sbr.rel (0) target = $region21
    $region20: #{tpu_custom_call.1} parent=1 // pred_region
      %168 = vsyncadd [#allocation4], 0
      %s169 = sshll.u32 [#allocation5], 4
      %s170 = int_to_ptr.vmem [resolvable:$true] %s169
      %s171 = sshll.u32 %s3, 4
      %s172 = int_to_ptr.hbm [resolvable:$true] %s171
      %177 = dma.vmem_to_hbm [thread:$0]  %s170, 256, %s172, [#allocation4], 128, 128, 8
    $region21: #{tpu_custom_call.1} parent=1 // pred_fallthru
      _
    // Predicated region
    $region22: #{tpu_custom_call.1} parent=1 // pred_check
      _
    $region23: #{tpu_custom_call.1} parent=1 // pred_check_branch
      %179 = sbr.rel (0) target = $region25
    $region24: #{tpu_custom_call.1} parent=1 // pred_region
      %181 = dma.done [#allocation4], 256
    $region25: #{tpu_custom_call.1} parent=1 // pred_fallthru
      _
    %182 = vsyncpa [#allocation3], 1
    %183 = vsyncpa [#allocation4], 1

</llo_original>
